<compile_context>
chip_gen: v7x
topology: tpu7x:2x2x1
jax: 0.10.0
libtpu: 0.0.40
codegen_flags: <defaults>
</compile_context>

<pallas_src>
import functools

import jax
import jax.numpy as jnp
from jax.experimental import pallas as pl
from jax.experimental.pallas import tpu as pltpu

HIDDEN = 128
SUBLANE = 8     # TPU sublane width (second-to-last-dim tile)


def _round_up(x, m):
    return ((x + m - 1) // m) * m


def _mlp_kernel(x_ref, w1_ref, b1_ref, w2_ref, b2_ref, w3_ref, b3_ref, o_ref):
    # x: (bb, obs_dim); weights resident; biases f32; f32 accumulation on the MXU.
    x = x_ref[...]
    h1 = jnp.dot(x, w1_ref[...], preferred_element_type=jnp.float32) + b1_ref[...]
    h1 = jnp.maximum(h1, 0.0)
    h2 = jnp.dot(h1.astype(w2_ref.dtype), w2_ref[...],
                 preferred_element_type=jnp.float32) + b2_ref[...]
    h2 = jnp.maximum(h2, 0.0)
    out = jnp.dot(h2.astype(w3_ref.dtype), w3_ref[...],
                  preferred_element_type=jnp.float32) + b3_ref[...]
    o_ref[...] = out.astype(o_ref.dtype)


@functools.partial(jax.jit, static_argnames=("block_b", "compute_dtype"))
def es_forward(observation, params, block_b=1024, compute_dtype=jnp.float32):
    """Forward pass of `es`.

    observation: (B, observation_dim) float32
    params: dict with w1 (obs,128), b1 (1,128), w2 (128,128), b2 (1,128),
            w3 (128,act), b3 (1,act)   -- weights already (in, out).
    compute_dtype: jnp.float32 (exact) or jnp.bfloat16 (faster streaming on v6e/v7x).
    """
    w1, b1 = params["w1"], params["b1"]
    w2, b2 = params["w2"], params["b2"]
    w3, b3 = params["w3"], params["b3"]

    B, obs_dim = observation.shape
    act_dim = w3.shape[1]

    # --- batch tile: multiple of 8 sublanes; large to fill MXU M and amortize per-step
    #     overhead.  If the whole (rounded) batch fits in one tile, split in two so the
    #     "parallel" grid axis has length >= 2 and shards across v7x's two TensorCores.
    b_rounded = _round_up(max(B, 1), SUBLANE)
    if b_rounded <= block_b:
        bb = max(SUBLANE, _round_up(pl.cdiv(b_rounded, 2), SUBLANE))
    else:
        bb = max(SUBLANE, _round_up(block_b, SUBLANE))
    grid = (pl.cdiv(B, bb),)   # partial last block is clipped by Pallas (no batch pad)

    x = observation.astype(compute_dtype)
    w1c = w1.astype(compute_dtype)
    w2c = w2.astype(compute_dtype)
    w3c = w3.astype(compute_dtype)
    b1f = b1.astype(jnp.float32)
    b2f = b2.astype(jnp.float32)
    b3f = b3.astype(jnp.float32)

    itemsize = jnp.dtype(compute_dtype).itemsize
    flops = 2 * B * (obs_dim * HIDDEN + HIDDEN * HIDDEN + HIDDEN * act_dim)
    bytes_accessed = (
        itemsize * (B * obs_dim + obs_dim * HIDDEN + HIDDEN * HIDDEN + HIDDEN * act_dim)
        + 4 * (B * act_dim + 2 * HIDDEN + act_dim)
    )

    out = pl.pallas_call(
        _mlp_kernel,
        out_shape=jax.ShapeDtypeStruct((B, act_dim), jnp.float32),
        grid_spec=pltpu.PrefetchScalarGridSpec(
            num_scalar_prefetch=0,
            grid=grid,
            in_specs=[
                # x tile: last dim == full obs_dim (waives the 128-lane rule), streams.
                pl.BlockSpec((bb, obs_dim), lambda i: (i, 0)),
                pl.BlockSpec((obs_dim, HIDDEN), lambda i: (0, 0)),   # w1 (resident)
                pl.BlockSpec((1, HIDDEN), lambda i: (0, 0)),         # b1
                pl.BlockSpec((HIDDEN, HIDDEN), lambda i: (0, 0)),    # w2
                pl.BlockSpec((1, HIDDEN), lambda i: (0, 0)),         # b2
                pl.BlockSpec((HIDDEN, act_dim), lambda i: (0, 0)),   # w3 (true width)
                pl.BlockSpec((1, act_dim), lambda i: (0, 0)),        # b3 (true width)
            ],
            # Output at its true act_dim width: 16x fewer output bytes than padding to
            # 128 lanes, and no post-slice kernel; OOB rows of the partial last block
            # are discarded by Pallas.
            out_specs=pl.BlockSpec((bb, act_dim), lambda i: (i, 0)),
        ),
        compiler_params=pltpu.CompilerParams(
            dimension_semantics=("parallel",),
        ),
        cost_estimate=pl.CostEstimate(
            flops=flops, transcendentals=0, bytes_accessed=bytes_accessed
        ),
    )(x, w1c, b1f, w2c, b2f, w3c, b3f)

    return out


def init_es_params(key, observation_dim, action_dim):
    """PyTorch-style init: U(-1/sqrt(fan_in), 1/sqrt(fan_in)); weights stored (in, out)."""
    def linear(key, fan_in, fan_out):
        kw, kb = jax.random.split(key)
        bound = 1.0 / jnp.sqrt(fan_in)
        w = jax.random.uniform(kw, (fan_in, fan_out), jnp.float32, -bound, bound)
        b = jax.random.uniform(kb, (1, fan_out), jnp.float32, -bound, bound)
        return w, b

    k1, k2, k3 = jax.random.split(key, 3)
    w1, b1 = linear(k1, observation_dim, HIDDEN)
    w2, b2 = linear(k2, HIDDEN, HIDDEN)
    w3, b3 = linear(k3, HIDDEN, action_dim)
    return {"w1": w1, "b1": b1, "w2": w2, "b2": b2, "w3": w3, "b3": b3}


def es_forward_ref(observation, params):
    """Plain-JAX reference mirroring the PyTorch forward."""
    h = jnp.maximum(observation @ params["w1"] + params["b1"], 0.0)
    h = jnp.maximum(h @ params["w2"] + params["b2"], 0.0)
    return h @ params["w3"] + params["b3"]


if __name__ == "__main__":
    observation_dim = 32
    action_dim = 8
    batch = 50  # deliberately not a multiple of 8 to exercise partial-block clipping

    key = jax.random.PRNGKey(0)
    k_params, k_obs = jax.random.split(key)

    params = init_es_params(k_params, observation_dim, action_dim)
    observation = jax.random.normal(k_obs, (batch, observation_dim), jnp.float32)

    ref = es_forward_ref(observation, params)

    # Exact (f32) path.
    out = es_forward(observation, params)
    out = jax.block_until_ready(out)
    assert out.shape == (batch, action_dim)
    assert jnp.allclose(out, ref, atol=1e-4, rtol=1e-4), "f32 mismatch vs reference"

    # bf16-streaming path (v6e/v7x bandwidth optimization) -- loose tolerance.
    out_bf16 = es_forward(observation, params, compute_dtype=jnp.bfloat16)
    out_bf16 = jax.block_until_ready(out_bf16)
    assert out_bf16.shape == (batch, action_dim)
    assert bool(jnp.all(jnp.isfinite(out_bf16)))
    assert jnp.allclose(out_bf16, ref, atol=1e-1, rtol=1e-1), "bf16 mismatch vs reference"

    print("KERNEL_OK")
</pallas_src>

<mosaic_0001>
module attributes {stable_mosaic.version = 11 : i64} {
  func.func @_mlp_kernel(%arg0: i32, %arg1: memref<32x32xf32, #tpu.memory_space<vmem>>, %arg2: memref<32x128xf32, #tpu.memory_space<vmem>>, %arg3: memref<1x128xf32, #tpu.memory_space<vmem>>, %arg4: memref<128x128xf32, #tpu.memory_space<vmem>>, %arg5: memref<1x128xf32, #tpu.memory_space<vmem>>, %arg6: memref<128x8xf32, #tpu.memory_space<vmem>>, %arg7: memref<1x8xf32, #tpu.memory_space<vmem>>, %arg8: memref<32x8xf32, #tpu.memory_space<vmem>>) attributes {dimension_semantics = [#tpu.dimension_semantics<parallel>], iteration_bounds = array<i64: 2>, scalar_prefetch = 0 : i64, scratch_operands = 0 : i64, tpu.core_type = #tpu.core_type<tc>, window_params = [{transform_indices = @transform_0, window_bounds = array<i64: 32, 32>}, {pipeline_mode = #tpu.pipeline_mode<synchronous>, transform_indices = @transform_1, window_bounds = array<i64: 32, 128>}, {pipeline_mode = #tpu.pipeline_mode<synchronous>, transform_indices = @transform_2, window_bounds = array<i64: 1, 128>}, {pipeline_mode = #tpu.pipeline_mode<synchronous>, transform_indices = @transform_3, window_bounds = array<i64: 128, 128>}, {pipeline_mode = #tpu.pipeline_mode<synchronous>, transform_indices = @transform_4, window_bounds = array<i64: 1, 128>}, {pipeline_mode = #tpu.pipeline_mode<synchronous>, transform_indices = @transform_5, window_bounds = array<i64: 128, 8>}, {pipeline_mode = #tpu.pipeline_mode<synchronous>, transform_indices = @transform_6, window_bounds = array<i64: 1, 8>}, {transform_indices = @transform_7, window_bounds = array<i64: 32, 8>}]} {
    %c0 = arith.constant 0 : index
    %c0_0 = arith.constant 0 : index
    %0 = vector.load %arg1[%c0, %c0_0] : memref<32x32xf32, #tpu.memory_space<vmem>>, vector<32x32xf32>
    %c0_1 = arith.constant 0 : index
    %c0_2 = arith.constant 0 : index
    %1 = vector.load %arg2[%c0_1, %c0_2] : memref<32x128xf32, #tpu.memory_space<vmem>>, vector<32x128xf32>
    %cst = arith.constant dense<0.000000e+00> : vector<32x128xf32>
    %2 = tpu.matmul %0, %1, %cst {dimension_numbers = #tpu.dot_dimension_numbers<[1], [0], [0], [1], [0, 0, 1, 1], [], []>} : vector<32x32xf32>, vector<32x128xf32>, vector<32x128xf32> -> vector<32x128xf32>
    %c0_3 = arith.constant 0 : index
    %c0_4 = arith.constant 0 : index
    %3 = vector.load %arg3[%c0_3, %c0_4] : memref<1x128xf32, #tpu.memory_space<vmem>>, vector<1x128xf32>
    %4 = vector.broadcast %3 : vector<1x128xf32> to vector<32x128xf32>
    %5 = arith.addf %2, %4 : vector<32x128xf32>
    %cst_5 = arith.constant 0.000000e+00 : f32
    %6 = vector.broadcast %cst_5 : f32 to vector<32x128xf32>
    %7 = arith.maximumf %5, %6 : vector<32x128xf32>
    %c0_6 = arith.constant 0 : index
    %c0_7 = arith.constant 0 : index
    %8 = vector.load %arg4[%c0_6, %c0_7] : memref<128x128xf32, #tpu.memory_space<vmem>>, vector<128x128xf32>
    %cst_8 = arith.constant dense<0.000000e+00> : vector<32x128xf32>
    %9 = tpu.matmul %7, %8, %cst_8 {dimension_numbers = #tpu.dot_dimension_numbers<[1], [0], [0], [1], [0, 0, 1, 1], [], []>} : vector<32x128xf32>, vector<128x128xf32>, vector<32x128xf32> -> vector<32x128xf32>
    %c0_9 = arith.constant 0 : index
    %c0_10 = arith.constant 0 : index
    %10 = vector.load %arg5[%c0_9, %c0_10] : memref<1x128xf32, #tpu.memory_space<vmem>>, vector<1x128xf32>
    %11 = vector.broadcast %10 : vector<1x128xf32> to vector<32x128xf32>
    %12 = arith.addf %9, %11 : vector<32x128xf32>
    %cst_11 = arith.constant 0.000000e+00 : f32
    %13 = vector.broadcast %cst_11 : f32 to vector<32x128xf32>
    %14 = arith.maximumf %12, %13 : vector<32x128xf32>
    %c0_12 = arith.constant 0 : index
    %c0_13 = arith.constant 0 : index
    %15 = vector.load %arg6[%c0_12, %c0_13] : memref<128x8xf32, #tpu.memory_space<vmem>>, vector<128x8xf32>
    %cst_14 = arith.constant dense<0.000000e+00> : vector<32x8xf32>
    %16 = tpu.matmul %14, %15, %cst_14 {dimension_numbers = #tpu.dot_dimension_numbers<[1], [0], [0], [1], [0, 0, 1, 1], [], []>} : vector<32x128xf32>, vector<128x8xf32>, vector<32x8xf32> -> vector<32x8xf32>
    %c0_15 = arith.constant 0 : index
    %c0_16 = arith.constant 0 : index
    %17 = vector.load %arg7[%c0_15, %c0_16] : memref<1x8xf32, #tpu.memory_space<vmem>>, vector<1x8xf32>
    %18 = vector.broadcast %17 : vector<1x8xf32> to vector<32x8xf32>
    %19 = arith.addf %16, %18 : vector<32x8xf32>
    %c0_17 = arith.constant 0 : index
    %c0_18 = arith.constant 0 : index
    %20 = vector.load %arg8[%c0_17, %c0_18] : memref<32x8xf32, #tpu.memory_space<vmem>>, vector<32x8xf32>
    tpu.vector_store %arg8[%c0_17, %c0_18], %19 {strides = array<i32>} : memref<32x8xf32, #tpu.memory_space<vmem>>, vector<32x8xf32>,
    return
  }
  func.func @transform_0(%arg0: i32) -> (i32, i32) {
    %c0_i32 = arith.constant 0 : i32
    %c0_i32_0 = arith.constant 0 : i32
    return %arg0, %c0_i32 : i32, i32
  }
  func.func @transform_1(%arg0: i32) -> (i32, i32) {
    %c0_i32 = arith.constant 0 : i32
    %c0_i32_0 = arith.constant 0 : i32
    %c0_i32_1 = arith.constant 0 : i32
    return %c0_i32, %c0_i32_0 : i32, i32
  }
  func.func @transform_2(%arg0: i32) -> (i32, i32) {
    %c0_i32 = arith.constant 0 : i32
    %c0_i32_0 = arith.constant 0 : i32
    %c0_i32_1 = arith.constant 0 : i32
    return %c0_i32, %c0_i32_0 : i32, i32
  }
  func.func @transform_3(%arg0: i32) -> (i32, i32) {
    %c0_i32 = arith.constant 0 : i32
    %c0_i32_0 = arith.constant 0 : i32
    %c0_i32_1 = arith.constant 0 : i32
    return %c0_i32, %c0_i32_0 : i32, i32
  }
  func.func @transform_4(%arg0: i32) -> (i32, i32) {
    %c0_i32 = arith.constant 0 : i32
    %c0_i32_0 = arith.constant 0 : i32
    %c0_i32_1 = arith.constant 0 : i32
    return %c0_i32, %c0_i32_0 : i32, i32
  }
  func.func @transform_5(%arg0: i32) -> (i32, i32) {
    %c0_i32 = arith.constant 0 : i32
    %c0_i32_0 = arith.constant 0 : i32
    %c0_i32_1 = arith.constant 0 : i32
    return %c0_i32, %c0_i32_0 : i32, i32
  }
  func.func @transform_6(%arg0: i32) -> (i32, i32) {
    %c0_i32 = arith.constant 0 : i32
    %c0_i32_0 = arith.constant 0 : i32
    %c0_i32_1 = arith.constant 0 : i32
    return %c0_i32, %c0_i32_0 : i32, i32
  }
  func.func @transform_7(%arg0: i32) -> (i32, i32) {
    %c0_i32 = arith.constant 0 : i32
    %c0_i32_0 = arith.constant 0 : i32
    return %arg0, %c0_i32 : i32, i32
  }
}

</mosaic_0001>

<llo_original>
// kernel: es_forward.1
$region0: #{es_forward.1}
  #allocation0 [shape = 'u32[]', space=smem, size = 0x4, offset = 0x4, fixed_abs, tag = 'smem constant byte address 0x4 - core index']
  #allocation1 [shape = 'u32[144,128]{1,0:T(1,128)}', space=vmem, size = 0x12000, scoped, tag = 'internal scratch']
  %s0 = inlined_call_operand.vmem [shape: f32[50,32], index: 0, kind: input, shape index: {}]
  %s1 = inlined_call_operand.vmem [shape: f32[32,128], index: 1, kind: input, shape index: {}]
  %s2 = inlined_call_operand.vmem [shape: f32[1,128], index: 2, kind: input, shape index: {}]
  %s3 = inlined_call_operand.vmem [shape: f32[128,128], index: 3, kind: input, shape index: {}]
  %s4 = inlined_call_operand.vmem [shape: f32[1,128], index: 4, kind: input, shape index: {}]
  %s5 = inlined_call_operand.vmem [shape: f32[128,8], index: 5, kind: input, shape index: {}]
  %s6 = inlined_call_operand.vmem [shape: f32[1,8], index: 6, kind: input, shape index: {}]
  %s7 = inlined_call_operand.vmem [shape: f32[50,8], index: 7, kind: output, shape index: {}]
  %s8 = sld [smem:[#allocation0]]
  $region109: #{es_forward.1} parent=0
    _
  %s10 = ssub.s32 1, %s8
  %s11 = scalar_select 0, %s10, %s8
  $region1: #{es_forward.1} parent=0
    #allocation2 [shape = 'u8[32768]{0}', space=vmem, size = 0x8000, scoped, tag = 'output window, operand 0']
    loop: start=0, step=1, limit=4
    $region2: #{es_forward.1} parent=1 // loop_pre_header
      _
    $region3: #{es_forward.1} parent=1 // loop_header
      %s13 = sphi 0, %s17
      %p14 = scmp.ge.s32.totalorder %s13, 4
      %s23 = sphi 0, %s25
      %s26 = sphi 0, %s23
      %s27 = sphi 0, %s26
      %s43 = sphi 0, %s27
      %s47 = sphi 0, %s47
      %s49 = sphi 0, %s47
      %s50 = sphi 0, %s49
      %s64 = sphi 0, %s50
      %s68 = sphi 0, %s68
      %s70 = sphi 0, %s68
      %s71 = sphi 0, %s70
      %s85 = sphi 0, %s71
      %s89 = sphi 0, %s89
      %s91 = sphi 0, %s89
      %s92 = sphi 0, %s91
      %s106 = sphi 0, %s92
      %s110 = sphi 0, %s110
      %s112 = sphi 0, %s110
      %s113 = sphi 0, %s112
      %s127 = sphi 0, %s113
      %s131 = sphi 0, %s131
      %s133 = sphi 0, %s131
      %s134 = sphi 0, %s133
      %s148 = sphi 0, %s134
      %s152 = sphi 0, %s152
      %s154 = sphi 0, %s152
      %s155 = sphi 0, %s154
      %s169 = sphi 0, %s155
      %s175 = sphi 0, %s177
      %s178 = sphi 0, %s175
      %s179 = sphi 0, %s178
      %s195 = sphi 0, %s179
    $region4: #{es_forward.1} parent=1 // loop_header_branch
      %16 = sbr.rel (%p14) target = $region8
    $region5: #{es_forward.1} parent=1 // loop_body
      %s18 = ssub.s32 %s13, 1
      %s19 = ssub.s32 %s13, 2
      %s20 = sadd.s32 %s13, 1
      %s21 = ssub.s32 %s13, %s20
      %p22 = scmp.eq.s32.totalorder %s21, 0
      %s24 = sadd.s32 %s23, 1
      %s25 = scalar_select %p22, %s23, %s24
      %p28 = pneg %p22
      %p29 = scmp.eq.s32.totalorder %s13, 1
      %p30 = por %p28, %p29
      %p31 = scmp.ne.s32.totalorder %s23, %s26
      %p32 = scmp.eq.s32.totalorder %s13, 0
      %p33 = por %p31, %p32
      %p34 = scmp.ne.s32.totalorder %s23, %s26
      %p35 = scmp.eq.s32.totalorder %s18, 1
      %p36 = por %p34, %p35
      %p37 = scmp.ne.s32.totalorder %s26, %s27
      %p38 = scmp.eq.s32.totalorder %s18, 0
      %p39 = por %p37, %p38
      %p40 = scmp.ne.s32.totalorder %s26, %s27
      %p41 = scmp.eq.s32.totalorder %s19, 1
      %p42 = por %p40, %p41
      %p44 = scmp.ne.s32.totalorder %s27, %s43
      %p45 = scmp.eq.s32.totalorder %s19, 0
      %p46 = por %p44, %p45
      %s48 = sadd.s32 %s47, 1
      %p51 = scmp.eq.s32.totalorder %s13, 1
      %p52 = scmp.ne.s32.totalorder %s47, %s49
      %p53 = scmp.eq.s32.totalorder %s13, 0
      %p54 = por %p52, %p53
      %p55 = scmp.ne.s32.totalorder %s47, %s49
      %p56 = scmp.eq.s32.totalorder %s18, 1
      %p57 = por %p55, %p56
      %p58 = scmp.ne.s32.totalorder %s49, %s50
      %p59 = scmp.eq.s32.totalorder %s18, 0
      %p60 = por %p58, %p59
      %p61 = scmp.ne.s32.totalorder %s49, %s50
      %p62 = scmp.eq.s32.totalorder %s19, 1
      %p63 = por %p61, %p62
      %p65 = scmp.ne.s32.totalorder %s50, %s64
      %p66 = scmp.eq.s32.totalorder %s19, 0
      %p67 = por %p65, %p66
      %s69 = sadd.s32 %s68, 1
      %p72 = scmp.eq.s32.totalorder %s13, 1
      %p73 = scmp.ne.s32.totalorder %s68, %s70
      %p74 = scmp.eq.s32.totalorder %s13, 0
      %p75 = por %p73, %p74
      %p76 = scmp.ne.s32.totalorder %s68, %s70
      %p77 = scmp.eq.s32.totalorder %s18, 1
      %p78 = por %p76, %p77
      %p79 = scmp.ne.s32.totalorder %s70, %s71
      %p80 = scmp.eq.s32.totalorder %s18, 0
      %p81 = por %p79, %p80
      %p82 = scmp.ne.s32.totalorder %s70, %s71
      %p83 = scmp.eq.s32.totalorder %s19, 1
      %p84 = por %p82, %p83
      %p86 = scmp.ne.s32.totalorder %s71, %s85
      %p87 = scmp.eq.s32.totalorder %s19, 0
      %p88 = por %p86, %p87
      %s90 = sadd.s32 %s89, 1
      %p93 = scmp.eq.s32.totalorder %s13, 1
      %p94 = scmp.ne.s32.totalorder %s89, %s91
      %p95 = scmp.eq.s32.totalorder %s13, 0
      %p96 = por %p94, %p95
      %p97 = scmp.ne.s32.totalorder %s89, %s91
      %p98 = scmp.eq.s32.totalorder %s18, 1
      %p99 = por %p97, %p98
      %p100 = scmp.ne.s32.totalorder %s91, %s92
      %p101 = scmp.eq.s32.totalorder %s18, 0
      %p102 = por %p100, %p101
      %p103 = scmp.ne.s32.totalorder %s91, %s92
      %p104 = scmp.eq.s32.totalorder %s19, 1
      %p105 = por %p103, %p104
      %p107 = scmp.ne.s32.totalorder %s92, %s106
      %p108 = scmp.eq.s32.totalorder %s19, 0
      %p109 = por %p107, %p108
      %s111 = sadd.s32 %s110, 1
      %p114 = scmp.eq.s32.totalorder %s13, 1
      %p115 = scmp.ne.s32.totalorder %s110, %s112
      %p116 = scmp.eq.s32.totalorder %s13, 0
      %p117 = por %p115, %p116
      %p118 = scmp.ne.s32.totalorder %s110, %s112
      %p119 = scmp.eq.s32.totalorder %s18, 1
      %p120 = por %p118, %p119
      %p121 = scmp.ne.s32.totalorder %s112, %s113
      %p122 = scmp.eq.s32.totalorder %s18, 0
      %p123 = por %p121, %p122
      %p124 = scmp.ne.s32.totalorder %s112, %s113
      %p125 = scmp.eq.s32.totalorder %s19, 1
      %p126 = por %p124, %p125
      %p128 = scmp.ne.s32.totalorder %s113, %s127
      %p129 = scmp.eq.s32.totalorder %s19, 0
      %p130 = por %p128, %p129
      %s132 = sadd.s32 %s131, 1
      %p135 = scmp.eq.s32.totalorder %s13, 1
      %p136 = scmp.ne.s32.totalorder %s131, %s133
      %p137 = scmp.eq.s32.totalorder %s13, 0
      %p138 = por %p136, %p137
      %p139 = scmp.ne.s32.totalorder %s131, %s133
      %p140 = scmp.eq.s32.totalorder %s18, 1
      %p141 = por %p139, %p140
      %p142 = scmp.ne.s32.totalorder %s133, %s134
      %p143 = scmp.eq.s32.totalorder %s18, 0
      %p144 = por %p142, %p143
      %p145 = scmp.ne.s32.totalorder %s133, %s134
      %p146 = scmp.eq.s32.totalorder %s19, 1
      %p147 = por %p145, %p146
      %p149 = scmp.ne.s32.totalorder %s134, %s148
      %p150 = scmp.eq.s32.totalorder %s19, 0
      %p151 = por %p149, %p150
      %s153 = sadd.s32 %s152, 1
      %p156 = scmp.eq.s32.totalorder %s13, 1
      %p157 = scmp.ne.s32.totalorder %s152, %s154
      %p158 = scmp.eq.s32.totalorder %s13, 0
      %p159 = por %p157, %p158
      %p160 = scmp.ne.s32.totalorder %s152, %s154
      %p161 = scmp.eq.s32.totalorder %s18, 1
      %p162 = por %p160, %p161
      %p163 = scmp.ne.s32.totalorder %s154, %s155
      %p164 = scmp.eq.s32.totalorder %s18, 0
      %p165 = por %p163, %p164
      %p166 = scmp.ne.s32.totalorder %s154, %s155
      %p167 = scmp.eq.s32.totalorder %s19, 1
      %p168 = por %p166, %p167
      %p170 = scmp.ne.s32.totalorder %s155, %s169
      %p171 = scmp.eq.s32.totalorder %s19, 0
      %p172 = por %p170, %p171
      %s173 = ssub.s32 %s13, %s20
      %p174 = scmp.eq.s32.totalorder %s173, 0
      %s176 = sadd.s32 %s175, 1
      %s177 = scalar_select %p174, %s175, %s176
      %p180 = pneg %p174
      %p181 = scmp.eq.s32.totalorder %s13, 1
      %p182 = por %p180, %p181
      %p183 = scmp.ne.s32.totalorder %s175, %s178
      %p184 = scmp.eq.s32.totalorder %s13, 0
      %p185 = por %p183, %p184
      %p186 = scmp.ne.s32.totalorder %s175, %s178
      %p187 = scmp.eq.s32.totalorder %s18, 1
      %p188 = por %p186, %p187
      %p189 = scmp.ne.s32.totalorder %s178, %s179
      %p190 = scmp.eq.s32.totalorder %s18, 0
      %p191 = por %p189, %p190
      %p192 = scmp.ne.s32.totalorder %s178, %s179
      %p193 = scmp.eq.s32.totalorder %s19, 1
      %p194 = por %p192, %p193
      %p196 = scmp.ne.s32.totalorder %s179, %s195
      %p197 = scmp.eq.s32.totalorder %s19, 0
      %p198 = por %p196, %p197
      %p199 = scmp.le.s32.totalorder 1, %s13
      %p200 = scmp.lt.s32.totalorder %s13, 3
      %p201 = pnand %p199, %p200
      %p202 = pneg %p201
      // Predicated region
      $region9: #{es_forward.1} parent=5 // pred_check
        _
      $region10: #{es_forward.1} parent=5 // pred_check_branch
        %204 = sbr.rel (%p201) target = $region12
      $region11: #{es_forward.1} parent=5 // pred_region
        %s205 = ssub.s32 %s13, 1
        // Predicated region
        $region13: #{es_forward.1} parent=11 // pred_check
          %p206 = pneg %p60
        $region14: #{es_forward.1} parent=11 // pred_check_branch
          %208 = sbr.rel (%p206) target = $region16
        $region15: #{es_forward.1} parent=11 // pred_region
          _
        $region16: #{es_forward.1} parent=11 // pred_fallthru
          _
        // Predicated region
        $region17: #{es_forward.1} parent=11 // pred_check
          %p209 = pneg %p81
        $region18: #{es_forward.1} parent=11 // pred_check_branch
          %211 = sbr.rel (%p209) target = $region20
        $region19: #{es_forward.1} parent=11 // pred_region
          _
        $region20: #{es_forward.1} parent=11 // pred_fallthru
          _
        // Predicated region
        $region21: #{es_forward.1} parent=11 // pred_check
          %p212 = pneg %p102
        $region22: #{es_forward.1} parent=11 // pred_check_branch
          %214 = sbr.rel (%p212) target = $region24
        $region23: #{es_forward.1} parent=11 // pred_region
          _
        $region24: #{es_forward.1} parent=11 // pred_fallthru
          _
        // Predicated region
        $region25: #{es_forward.1} parent=11 // pred_check
          %p215 = pneg %p123
        $region26: #{es_forward.1} parent=11 // pred_check_branch
          %217 = sbr.rel (%p215) target = $region28
        $region27: #{es_forward.1} parent=11 // pred_region
          _
        $region28: #{es_forward.1} parent=11 // pred_fallthru
          _
        // Predicated region
        $region29: #{es_forward.1} parent=11 // pred_check
          %p218 = pneg %p144
        $region30: #{es_forward.1} parent=11 // pred_check_branch
          %220 = sbr.rel (%p218) target = $region32
        $region31: #{es_forward.1} parent=11 // pred_region
          _
        $region32: #{es_forward.1} parent=11 // pred_fallthru
          _
        // Predicated region
        $region33: #{es_forward.1} parent=11 // pred_check
          %p221 = pneg %p165
        $region34: #{es_forward.1} parent=11 // pred_check_branch
          %223 = sbr.rel (%p221) target = $region36
        $region35: #{es_forward.1} parent=11 // pred_region
          _
        $region36: #{es_forward.1} parent=11 // pred_fallthru
          _
      $region12: #{es_forward.1} parent=5 // pred_fallthru
        _
      %p224 = scmp.lt.s32.totalorder %s13, 2
      // Predicated region
      $region37: #{es_forward.1} parent=5 // pred_check
        %p225 = pneg %p224
      $region38: #{es_forward.1} parent=5 // pred_check_branch
        %227 = sbr.rel (%p225) target = $region40
      $region39: #{es_forward.1} parent=5 // pred_region
        // Predicated region
        $region41: #{es_forward.1} parent=39 // pred_check
          %p228 = pneg %p33
        $region42: #{es_forward.1} parent=39 // pred_check_branch
          %230 = sbr.rel (%p228) target = $region44
        $region43: #{es_forward.1} parent=39 // pred_region
          %s231 = smul.u32 4, %s13
          %s232 = ssub.s32 7, %s231
          %p233 = scmp.lt.s32.totalorder %s232, 4
          %s234 = scalar_select %p233, %s232, 4
          %s235 = smul.u32 128, %s234
          %p236 = scmp.lt.s32.totalorder %s231, 6
          %s237 = scalar_select %p236, %s231, 6
          %s238 = smul.addr %s237, 8
          %s239 = scalar_lea.vmem %s0, %s238
          %s240 = smul.u32 4, %s13
          %s241 = ssub.s32 7, %s240
          %p242 = scmp.lt.s32.totalorder %s241, 4
          %s243 = scalar_select %p242, %s241, 4
          %s244 = smul.u32 128, %s243
        $region44: #{es_forward.1} parent=39 // pred_fallthru
          _
      $region40: #{es_forward.1} parent=5 // pred_fallthru
        _
      %p245 = scmp.le.s32.totalorder 1, %s13
      %p246 = scmp.lt.s32.totalorder %s13, 3
      %p247 = pnand %p245, %p246
      %p248 = pneg %p247
      // Predicated region
      $region45: #{es_forward.1} parent=5 // pred_check
        _
      $region46: #{es_forward.1} parent=5 // pred_check_branch
        %250 = sbr.rel (%p247) target = $region48
      $region47: #{es_forward.1} parent=5 // pred_region
        %s251 = ssub.s32 %s13, 1
        %s252 = smul.u32 4, %s18
        %s253 = ssub.s32 7, %s252
        %p254 = scmp.lt.s32.totalorder %s253, 4
        %s255 = scalar_select %p254, %s253, 4
        %s256 = smul.u32 128, %s255
        %p257 = scmp.lt.s32.totalorder %s252, 6
        %s258 = scalar_select %p257, %s252, 6
        %s259 = smul.addr %s258, 8
        %s260 = scalar_lea.vmem %s0, %s259
        %p261 = pneg %p39
        %p262 = pneg %p36
        %p263 = pneg %p60
        %p264 = pneg %p57
        %p265 = pneg %p81
        %p266 = pneg %p78
        %p267 = pneg %p102
        %p268 = pneg %p99
        %p269 = pneg %p123
        %p270 = pneg %p120
        %p271 = pneg %p144
        %p272 = pneg %p141
        %p273 = pneg %p165
        %p274 = pneg %p162
        %p275 = pneg %p191
        %p276 = pneg %p188
        %s277 = sand.u32 %s178, 1
        %s278 = sand.u32 %s178, 1
        %s279 = smul.addr %s278, 32
        %s280 = scalar_lea.vmem [#allocation2], %s279
        %s281 = smul.u32 4, %s18
        %s282 = ssub.s32 7, %s281
        %p283 = scmp.lt.s32.totalorder %s282, 4
        %s284 = scalar_select %p283, %s282, 4
        %s285 = smul.u32 128, %s284
        %p286 = scmp.lt.s32.totalorder %s281, 6
        %s287 = scalar_select %p286, %s281, 6
        %s288 = smul.addr %s287, 8
        %s289 = scalar_lea.vmem %s0, %s288
        %s290 = smul.u32 4, %s18
        %s291 = ssub.s32 7, %s290
        %p292 = scmp.lt.s32.totalorder %s291, 4
        %s293 = scalar_select %p292, %s291, 4
        %s294 = smul.u32 128, %s293
        %s295 = smul.u32 4, %s18
        %s296 = ssub.s32 7, %s295
        %p297 = scmp.lt.s32.totalorder %s296, 4
        %s298 = scalar_select %p297, %s296, 4
        %s299 = smul.u32 128, %s298
        %v300 = vld [vmem:[%s289] sm:$0xff]
        %v301 = vld [vmem:[%s289 + $0x8] sm:$0xff]
        %v302 = vld [vmem:[%s289 + $0x10] sm:$0xff]
        %v303 = vld [vmem:[%s289 + $0x18] sm:$0xff]
        %v304 = vld [vmem:[%s1] sm:$0xff]
        %v305 = vld [vmem:[%s1 + $0x8] sm:$0xff]
        %v306 = vld [vmem:[%s1 + $0x10] sm:$0xff]
        %v307 = vld [vmem:[%s1 + $0x18] sm:$0xff]
        %v308 = vld [vmem:[%s2] sm:$0x1]
        %v310 = vlaneseq
        %v311 = vshrl.u32 %v310, 7
        %v312 = vsub.s32 0, %v311
        %v313 = vrot.slane %v308, %v312
        %vm315 = vcmask 261120
        %v317 = vsel %vm315, %v300, 0
        %v320 = vsel %vm315, %v301, 0
        %v323 = vsel %vm315, %v302, 0
        %v326 = vsel %vm315, %v303, 0
        %328 = vmatprep.subr.mxu0 0.0
        %329 = vmatpush1.msra.mxu0 %v304
        %330 = vmatprep.subr.mxu0 0.0
        %331 = vmatpush1.msra.mxu0 %v305
        %332 = vmatprep.subr.mxu0 0.0
        %333 = vmatpush1.msra.mxu0 %v306
        %334 = vmatprep.subr.mxu0 0.0
        %335 = vmatpush1.msra.mxu0 %v307
        %336 = vmatprep.subr.mxu0 0.0
        %337 = vmatpush1.msra.mxu0 0.0
        %338 = vmatprep.subr.mxu0 0.0
        %339 = vmatpush1.msra.mxu0 0.0
        %340 = vmatprep.subr.mxu0 0.0
        %341 = vmatpush1.msra.mxu0 0.0
        %342 = vmatprep.subr.mxu0 0.0
        %343 = vmatpush1.msra.mxu0 0.0
        %344 = vmatprep.subr.mxu0 0.0
        %345 = vmatpush1.msra.mxu0 0.0
        %346 = vmatprep.subr.mxu0 0.0
        %347 = vmatpush1.msra.mxu0 0.0
        %348 = vmatprep.subr.mxu0 0.0
        %349 = vmatpush1.msra.mxu0 0.0
        %350 = vmatprep.subr.mxu0 0.0
        %351 = vmatpush1.msra.mxu0 0.0
        %352 = vmatprep.subr.mxu0 0.0
        %353 = vmatpush1.msra.mxu0 0.0
        %354 = vmatprep.subr.mxu0 0.0
        %355 = vmatpush1.msra.mxu0 0.0
        %356 = vmatprep.subr.mxu0 0.0
        %357 = vmatpush1.msra.mxu0 0.0
        %358 = vmatprep.subr.mxu0 0.0
        %359 = vmatpush1.msra.mxu0 0.0
        %360 = vmatprep.subr.mxu0 0.0
        %361 = vmatpush1.msra.mxu0 0.0
        %362 = vmatprep.subr.mxu0 0.0
        %363 = vmatpush1.msra.mxu0 0.0
        %364 = vmatprep.subr.mxu0 0.0
        %365 = vmatpush1.msra.mxu0 0.0
        %366 = vmatprep.subr.mxu0 0.0
        %367 = vmatpush1.msra.mxu0 0.0
        %368 = vmatprep.subr.mxu0 0.0
        %369 = vmatpush1.msra.mxu0 0.0
        %370 = vmatprep.subr.mxu0 0.0
        %371 = vmatpush1.msra.mxu0 0.0
        %372 = vmatprep.subr.mxu0 0.0
        %373 = vmatpush1.msra.mxu0 0.0
        %374 = vmatprep.subr.mxu0 0.0
        %375 = vmatpush1.msra.mxu0 0.0
        %376 = vmatprep.subr.mxu0 0.0
        %377 = vmatpush1.msra.mxu0 0.0
        %378 = vmatprep.subr.mxu0 0.0
        %379 = vmatpush1.msra.mxu0 0.0
        %380 = vmatprep.subr.mxu0 0.0
        %381 = vmatpush1.msra.mxu0 0.0
        %382 = vmatprep.subr.mxu0 0.0
        %383 = vmatpush1.msra.mxu0 0.0
        %384 = vmatprep.subr.mxu0 0.0
        %385 = vmatpush1.msra.mxu0 0.0
        %386 = vmatprep.subr.mxu0 0.0
        %387 = vmatpush1.msra.mxu0 0.0
        %388 = vmatprep.subr.mxu0 0.0
        %389 = vmatpush1.msra.mxu0 0.0
        %390 = vmatprep.subr.mxu0 0.0
        %391 = vmatpush1.msra.mxu0 0.0
        %392 = vmatprep.mubr.f32.mxu0 0.0
        %393 = vmatmul.mubr.f32.gmra.mrb[0].mxu0 %v317
        %v394 = vpop.f32.mrb[0].mxu0
        %v395 = vadd.f32 %v313, %v394
        %v396 = vpop.f32.mrb[0].mxu0
        %397 = vmatprep.mubr.f32.mxu0 0.0
        %398 = vmatmul.mubr.f32.gmra.mrb[0].mxu0 %v320
        %v399 = vpop.f32.mrb[0].mxu0
        %v400 = vadd.f32 %v313, %v399
        %v401 = vpop.f32.mrb[0].mxu0
        %402 = vmatprep.mubr.f32.mxu0 0.0
        %403 = vmatmul.mubr.f32.gmra.mrb[0].mxu0 %v323
        %v404 = vpop.f32.mrb[0].mxu0
        %v405 = vadd.f32 %v313, %v404
        %v406 = vpop.f32.mrb[0].mxu0
        %407 = vmatprep.mubr.f32.mxu0 0.0
        %408 = vmatmul.mubr.f32.gmra.mrb[0].mxu0 %v326
        %v409 = vpop.f32.mrb[0].mxu0
        %v410 = vadd.f32 %v313, %v409
        %v411 = vpop.f32.mrb[0].mxu0
        %412 = vdwg.mxu0
        %v413 = vmax.f32 %v395, 0.0
        %v414 = vmax.f32 %v400, 0.0
        %v415 = vmax.f32 %v405, 0.0
        %v416 = vmax.f32 %v410, 0.0
        %v417 = vld [vmem:[%s3] sm:$0xff]
        %v418 = vld [vmem:[%s3 + $0x8] sm:$0xff]
        %v419 = vld [vmem:[%s3 + $0x10] sm:$0xff]
        %v420 = vld [vmem:[%s3 + $0x18] sm:$0xff]
        %v421 = vld [vmem:[%s3 + $0x20] sm:$0xff]
        %v422 = vld [vmem:[%s3 + $0x28] sm:$0xff]
        %v423 = vld [vmem:[%s3 + $0x30] sm:$0xff]
        %v424 = vld [vmem:[%s3 + $0x38] sm:$0xff]
        %v425 = vld [vmem:[%s3 + $0x40] sm:$0xff]
        %v426 = vld [vmem:[%s3 + $0x48] sm:$0xff]
        %v427 = vld [vmem:[%s3 + $0x50] sm:$0xff]
        %v428 = vld [vmem:[%s3 + $0x58] sm:$0xff]
        %v429 = vld [vmem:[%s3 + $0x60] sm:$0xff]
        %v430 = vld [vmem:[%s3 + $0x68] sm:$0xff]
        %v431 = vld [vmem:[%s3 + $0x70] sm:$0xff]
        %v432 = vld [vmem:[%s3 + $0x78] sm:$0xff]
        %v433 = vld [vmem:[%s4] sm:$0x1]
        %v435 = vlaneseq
        %v436 = vshrl.u32 %v435, 7
        %v437 = vsub.s32 0, %v436
        %v438 = vrot.slane %v433, %v437
        %440 = vmatprep.subr.mxu0 0.0
        %441 = vmatpush1.msra.mxu0 %v417
        %442 = vmatprep.subr.mxu0 0.0
        %443 = vmatpush1.msra.mxu0 %v418
        %444 = vmatprep.subr.mxu0 0.0
        %445 = vmatpush1.msra.mxu0 %v419
        %446 = vmatprep.subr.mxu0 0.0
        %447 = vmatpush1.msra.mxu0 %v420
        %448 = vmatprep.subr.mxu0 0.0
        %449 = vmatpush1.msra.mxu0 %v421
        %450 = vmatprep.subr.mxu0 0.0
        %451 = vmatpush1.msra.mxu0 %v422
        %452 = vmatprep.subr.mxu0 0.0
        %453 = vmatpush1.msra.mxu0 %v423
        %454 = vmatprep.subr.mxu0 0.0
        %455 = vmatpush1.msra.mxu0 %v424
        %456 = vmatprep.subr.mxu0 0.0
        %457 = vmatpush1.msra.mxu0 %v425
        %458 = vmatprep.subr.mxu0 0.0
        %459 = vmatpush1.msra.mxu0 %v426
        %460 = vmatprep.subr.mxu0 0.0
        %461 = vmatpush1.msra.mxu0 %v427
        %462 = vmatprep.subr.mxu0 0.0
        %463 = vmatpush1.msra.mxu0 %v428
        %464 = vmatprep.subr.mxu0 0.0
        %465 = vmatpush1.msra.mxu0 %v429
        %466 = vmatprep.subr.mxu0 0.0
        %467 = vmatpush1.msra.mxu0 %v430
        %468 = vmatprep.subr.mxu0 0.0
        %469 = vmatpush1.msra.mxu0 %v431
        %470 = vmatprep.subr.mxu0 0.0
        %471 = vmatpush1.msra.mxu0 %v432
        %472 = vmatprep.subr.mxu0 0.0
        %473 = vmatpush1.msra.mxu0 0.0
        %474 = vmatprep.subr.mxu0 0.0
        %475 = vmatpush1.msra.mxu0 0.0
        %476 = vmatprep.subr.mxu0 0.0
        %477 = vmatpush1.msra.mxu0 0.0
        %478 = vmatprep.subr.mxu0 0.0
        %479 = vmatpush1.msra.mxu0 0.0
        %480 = vmatprep.subr.mxu0 0.0
        %481 = vmatpush1.msra.mxu0 0.0
        %482 = vmatprep.subr.mxu0 0.0
        %483 = vmatpush1.msra.mxu0 0.0
        %484 = vmatprep.subr.mxu0 0.0
        %485 = vmatpush1.msra.mxu0 0.0
        %486 = vmatprep.subr.mxu0 0.0
        %487 = vmatpush1.msra.mxu0 0.0
        %488 = vmatprep.subr.mxu0 0.0
        %489 = vmatpush1.msra.mxu0 0.0
        %490 = vmatprep.subr.mxu0 0.0
        %491 = vmatpush1.msra.mxu0 0.0
        %492 = vmatprep.subr.mxu0 0.0
        %493 = vmatpush1.msra.mxu0 0.0
        %494 = vmatprep.subr.mxu0 0.0
        %495 = vmatpush1.msra.mxu0 0.0
        %496 = vmatprep.subr.mxu0 0.0
        %497 = vmatpush1.msra.mxu0 0.0
        %498 = vmatprep.subr.mxu0 0.0
        %499 = vmatpush1.msra.mxu0 0.0
        %500 = vmatprep.subr.mxu0 0.0
        %501 = vmatpush1.msra.mxu0 0.0
        %502 = vmatprep.subr.mxu0 0.0
        %503 = vmatpush1.msra.mxu0 0.0
        %504 = vmatprep.mubr.f32.mxu0 0.0
        %505 = vmatmul.mubr.f32.gmra.mrb[0].mxu0 %v413
        %v506 = vpop.f32.mrb[0].mxu0
        %v507 = vadd.f32 %v438, %v506
        %v508 = vpop.f32.mrb[0].mxu0
        %509 = vmatprep.mubr.f32.mxu0 0.0
        %510 = vmatmul.mubr.f32.gmra.mrb[0].mxu0 %v414
        %v511 = vpop.f32.mrb[0].mxu0
        %v512 = vadd.f32 %v438, %v511
        %v513 = vpop.f32.mrb[0].mxu0
        %514 = vmatprep.mubr.f32.mxu0 0.0
        %515 = vmatmul.mubr.f32.gmra.mrb[0].mxu0 %v415
        %v516 = vpop.f32.mrb[0].mxu0
        %v517 = vadd.f32 %v438, %v516
        %v518 = vpop.f32.mrb[0].mxu0
        %519 = vmatprep.mubr.f32.mxu0 0.0
        %520 = vmatmul.mubr.f32.gmra.mrb[0].mxu0 %v416
        %v521 = vpop.f32.mrb[0].mxu0
        %v522 = vadd.f32 %v438, %v521
        %v523 = vpop.f32.mrb[0].mxu0
        %524 = vdwg.mxu0
        %v525 = vmax.f32 %v507, 0.0
        %v526 = vmax.f32 %v512, 0.0
        %v527 = vmax.f32 %v517, 0.0
        %v528 = vmax.f32 %v522, 0.0
        %v529 = vld [vmem:[%s5] sm:$0xff]
        %v530 = vld [vmem:[%s5 + $0x8] sm:$0xff]
        %v531 = vld [vmem:[%s5 + $0x10] sm:$0xff]
        %v532 = vld [vmem:[%s5 + $0x18] sm:$0xff]
        %v533 = vld [vmem:[%s5 + $0x20] sm:$0xff]
        %v534 = vld [vmem:[%s5 + $0x28] sm:$0xff]
        %v535 = vld [vmem:[%s5 + $0x30] sm:$0xff]
        %v536 = vld [vmem:[%s5 + $0x38] sm:$0xff]
        %v537 = vld [vmem:[%s5 + $0x40] sm:$0xff]
        %v538 = vld [vmem:[%s5 + $0x48] sm:$0xff]
        %v539 = vld [vmem:[%s5 + $0x50] sm:$0xff]
        %v540 = vld [vmem:[%s5 + $0x58] sm:$0xff]
        %v541 = vld [vmem:[%s5 + $0x60] sm:$0xff]
        %v542 = vld [vmem:[%s5 + $0x68] sm:$0xff]
        %v543 = vld [vmem:[%s5 + $0x70] sm:$0xff]
        %v544 = vld [vmem:[%s5 + $0x78] sm:$0xff]
        %v545 = vld [vmem:[%s6] sm:$0x1]
        %v547 = vlaneseq
        %v548 = vshrl.u32 %v547, 7
        %v549 = vsub.s32 0, %v548
        %v550 = vrot.slane %v545, %v549
        %552 = vmatprep.subr.mxu0 0.0
        %553 = vmatpush1.msra.mxu0 %v529
        %554 = vmatprep.subr.mxu0 0.0
        %555 = vmatpush1.msra.mxu0 %v530
        %556 = vmatprep.subr.mxu0 0.0
        %557 = vmatpush1.msra.mxu0 %v531
        %558 = vmatprep.subr.mxu0 0.0
        %559 = vmatpush1.msra.mxu0 %v532
        %560 = vmatprep.subr.mxu0 0.0
        %561 = vmatpush1.msra.mxu0 %v533
        %562 = vmatprep.subr.mxu0 0.0
        %563 = vmatpush1.msra.mxu0 %v534
        %564 = vmatprep.subr.mxu0 0.0
        %565 = vmatpush1.msra.mxu0 %v535
        %566 = vmatprep.subr.mxu0 0.0
        %567 = vmatpush1.msra.mxu0 %v536
        %568 = vmatprep.subr.mxu0 0.0
        %569 = vmatpush1.msra.mxu0 %v537
        %570 = vmatprep.subr.mxu0 0.0
        %571 = vmatpush1.msra.mxu0 %v538
        %572 = vmatprep.subr.mxu0 0.0
        %573 = vmatpush1.msra.mxu0 %v539
        %574 = vmatprep.subr.mxu0 0.0
        %575 = vmatpush1.msra.mxu0 %v540
        %576 = vmatprep.subr.mxu0 0.0
        %577 = vmatpush1.msra.mxu0 %v541
        %578 = vmatprep.subr.mxu0 0.0
        %579 = vmatpush1.msra.mxu0 %v542
        %580 = vmatprep.subr.mxu0 0.0
        %581 = vmatpush1.msra.mxu0 %v543
        %582 = vmatprep.subr.mxu0 0.0
        %583 = vmatpush1.msra.mxu0 %v544
        %584 = vmatprep.subr.mxu0 0.0
        %585 = vmatpush1.msra.mxu0 0.0
        %586 = vmatprep.subr.mxu0 0.0
        %587 = vmatpush1.msra.mxu0 0.0
        %588 = vmatprep.subr.mxu0 0.0
        %589 = vmatpush1.msra.mxu0 0.0
        %590 = vmatprep.subr.mxu0 0.0
        %591 = vmatpush1.msra.mxu0 0.0
        %592 = vmatprep.subr.mxu0 0.0
        %593 = vmatpush1.msra.mxu0 0.0
        %594 = vmatprep.subr.mxu0 0.0
        %595 = vmatpush1.msra.mxu0 0.0
        %596 = vmatprep.subr.mxu0 0.0
        %597 = vmatpush1.msra.mxu0 0.0
        %598 = vmatprep.subr.mxu0 0.0
        %599 = vmatpush1.msra.mxu0 0.0
        %600 = vmatprep.subr.mxu0 0.0
        %601 = vmatpush1.msra.mxu0 0.0
        %602 = vmatprep.subr.mxu0 0.0
        %603 = vmatpush1.msra.mxu0 0.0
        %604 = vmatprep.subr.mxu0 0.0
        %605 = vmatpush1.msra.mxu0 0.0
        %606 = vmatprep.subr.mxu0 0.0
        %607 = vmatpush1.msra.mxu0 0.0
        %608 = vmatprep.subr.mxu0 0.0
        %609 = vmatpush1.msra.mxu0 0.0
        %610 = vmatprep.subr.mxu0 0.0
        %611 = vmatpush1.msra.mxu0 0.0
        %612 = vmatprep.subr.mxu0 0.0
        %613 = vmatpush1.msra.mxu0 0.0
        %614 = vmatprep.subr.mxu0 0.0
        %615 = vmatpush1.msra.mxu0 0.0
        %616 = vmatprep.mubr.f32.mxu0 0.0
        %617 = vmatmul.mubr.f32.gmra.mrb[0].mxu0 %v525
        %v618 = vpop.f32.mrb[0].mxu0
        %v619 = vadd.f32 %v550, %v618
        %v620 = vpop.f32.mrb[0].mxu0
        %621 = vmatprep.mubr.f32.mxu0 0.0
        %622 = vmatmul.mubr.f32.gmra.mrb[0].mxu0 %v526
        %v623 = vpop.f32.mrb[0].mxu0
        %v624 = vadd.f32 %v550, %v623
        %v625 = vpop.f32.mrb[0].mxu0
        %626 = vmatprep.mubr.f32.mxu0 0.0
        %627 = vmatmul.mubr.f32.gmra.mrb[0].mxu0 %v527
        %v628 = vpop.f32.mrb[0].mxu0
        %v629 = vadd.f32 %v550, %v628
        %v630 = vpop.f32.mrb[0].mxu0
        %631 = vmatprep.mubr.f32.mxu0 0.0
        %632 = vmatmul.mubr.f32.gmra.mrb[0].mxu0 %v528
        %v633 = vpop.f32.mrb[0].mxu0
        %v634 = vadd.f32 %v550, %v633
        %v635 = vpop.f32.mrb[0].mxu0
        %636 = vdwg.mxu0
        %vm637 = vcmask 64512
        %638 = vst.msk [vmem:[%s280] sm:$0xff] %vm637, %v619
        %639 = vst.msk [vmem:[%s280 + $0x8] sm:$0xff] %vm637, %v624
        %640 = vst.msk [vmem:[%s280 + $0x10] sm:$0xff] %vm637, %v629
        %641 = vst.msk [vmem:[%s280 + $0x18] sm:$0xff] %vm637, %v634
        %s642 = sand.u32 %s178, 1
        %s643 = sand.u32 %s178, 1
        %s644 = smul.addr %s643, 32
        %s645 = scalar_lea.vmem [#allocation2], %s644
        // Predicated region
        $region49: #{es_forward.1} parent=47 // pred_check
          %p646 = pneg %p188
        $region50: #{es_forward.1} parent=47 // pred_check_branch
          %648 = sbr.rel (%p646) target = $region52
        $region51: #{es_forward.1} parent=47 // pred_region
          %s649 = smul.u32 4, %s18
          %s650 = ssub.s32 7, %s649
          %p651 = scmp.lt.s32.totalorder %s650, 4
          %s652 = scalar_select %p651, %s650, 4
          %s653 = smul.u32 128, %s652
          %p654 = scmp.ne.s32.totalorder 0, %s653
          %s655 = smul.addr %s649, 8
          %s656 = scalar_lea.vmem %s7, %s655
          // Predicated region
          $region53: #{es_forward.1} parent=51 // pred_check
            %p657 = pneg %p654
          $region54: #{es_forward.1} parent=51 // pred_check_branch
            %659 = sbr.rel (%p657) target = $region56
          $region55: #{es_forward.1} parent=51 // pred_region
            // Predicated region
            $region57: #{es_forward.1} parent=55 // pred_check
              _
            $region58: #{es_forward.1} parent=55 // pred_check_branch
              %661 = sbr.rel (0) target = $region60
            $region59: #{es_forward.1} parent=55 // pred_region
              // Predicated region
              $region79: #{es_forward.1} parent=59 // pred_check
                _
              $region80: #{es_forward.1} parent=59 // pred_check_branch
                %716 = sbr.rel (0) target = $region82
              $region81: #{es_forward.1} parent=59 // pred_region
                %s717 = sshrl.u32 %s652, 2
                // While loop
                $region83: #{es_forward.1} parent=81 // loop_pre_header
                  _
                $region84: #{es_forward.1} parent=81 // loop_header
                  %s719 = sphi 0, %s721
                  %p720 = scmp.ge.s32.totalorder %s719, %s717
                  %s724 = sphi 0, %s737
                  %s725 = sphi %s645, %s740
                  %s726 = sphi %s656, %s741
                $region85: #{es_forward.1} parent=81 // loop_header_branch
                  %723 = sbr.rel (%p720) target = $region89
                $region86: #{es_forward.1} parent=81 // loop_body
                  %v727 = vld [vmem:[%s725] sm:$0xff]
                  %728 = vst [vmem:[%s726] sm:$0xff] %v727
                  %v729 = vld [vmem:[%s725 + $0x8] sm:$0xff]
                  %730 = vst [vmem:[%s726 + $0x8] sm:$0xff] %v729
                  %v731 = vld [vmem:[%s725 + $0x10] sm:$0xff]
                  %732 = vst [vmem:[%s726 + $0x10] sm:$0xff] %v731
                  %v733 = vld [vmem:[%s725 + $0x18] sm:$0xff]
                  %734 = vst [vmem:[%s726 + $0x18] sm:$0xff] %v733
                  %s735 = sadd.s32 1, %s724
                  %p736 = scmp.ge.s32.totalorder %s735, %s717
                  %s737 = scalar_select %p736, 0, %s735
                  %s738 = smul.u32 %s737, 32
                  %s739 = smul.u32 %s737, 32
                  %s740 = scalar_lea.vmem %s645, %s738 [#allocation2]
                  %s741 = scalar_lea.vmem %s656, %s739
                $region87: #{es_forward.1} parent=81 // loop_footer
                  %s721 = sadd.s32 %s719, 1
                $region88: #{es_forward.1} parent=81 // loop_footer_branch
                  %718 = sbr.rel target = $region84
                $region89: #{es_forward.1} parent=81 // loop_exit
                  _
                %s742 = sshrl.u32 %s652, 2
                %s743 = sand.u32 %s652, 3
                %s744 = smul.u32 %s742, 4
                %s745 = smul.u32 8, %s744
                %s746 = scalar_lea.vmem %s645, %s745 [#allocation2]
                %s747 = smul.u32 8, %s744
                %s748 = scalar_lea.vmem %s656, %s747
                // While loop
                $region90: #{es_forward.1} parent=81 // loop_pre_header
                  _
                $region91: #{es_forward.1} parent=81 // loop_header
                  %s750 = sphi 0, %s752
                  %p751 = scmp.ge.s32.totalorder %s750, %s743
                  %s755 = sphi 0, %s762
                  %s756 = sphi %s746, %s765
                  %s757 = sphi %s748, %s766
                $region92: #{es_forward.1} parent=81 // loop_header_branch
                  %754 = sbr.rel (%p751) target = $region96
                $region93: #{es_forward.1} parent=81 // loop_body
                  %v758 = vld [vmem:[%s756] sm:$0xff]
                  %759 = vst [vmem:[%s757] sm:$0xff] %v758
                  %s760 = sadd.s32 1, %s755
                  %p761 = scmp.ge.s32.totalorder %s760, %s743
                  %s762 = scalar_select %p761, 0, %s760
                  %s763 = smul.u32 %s762, 8
                  %s764 = smul.u32 %s762, 8
                  %s765 = scalar_lea.vmem %s746, %s763 [#allocation2]
                  %s766 = scalar_lea.vmem %s748, %s764
                $region94: #{es_forward.1} parent=81 // loop_footer
                  %s752 = sadd.s32 %s750, 1
                $region95: #{es_forward.1} parent=81 // loop_footer_branch
                  %749 = sbr.rel target = $region91
                $region96: #{es_forward.1} parent=81 // loop_exit
                  _
              $region82: #{es_forward.1} parent=59 // pred_fallthru
                _
              // Predicated region
              $region97: #{es_forward.1} parent=59 // pred_check
                _
              $region98: #{es_forward.1} parent=59 // pred_check_branch
                %768 = sbr.rel target = $region100
              $region99: #{es_forward.1} parent=59 // pred_region
                _
              $region100: #{es_forward.1} parent=59 // pred_fallthru
                _
            $region60: #{es_forward.1} parent=55 // pred_fallthru
              _
            // Predicated region
            $region61: #{es_forward.1} parent=55 // pred_check
              _
            $region62: #{es_forward.1} parent=55 // pred_check_branch
              %663 = sbr.rel target = $region64
            $region63: #{es_forward.1} parent=55 // pred_region
              %s665 = sshrl.u32 %s652, 2
              // While loop
              $region65: #{es_forward.1} parent=63 // loop_pre_header
                _
              $region66: #{es_forward.1} parent=63 // loop_header
                %s667 = sphi 0, %s669
                %p668 = scmp.ge.s32.totalorder %s667, %s665
                %s672 = sphi 0, %s685
                %s673 = sphi %s645, %s688
                %s674 = sphi %s656, %s689
              $region67: #{es_forward.1} parent=63 // loop_header_branch
                %671 = sbr.rel (%p668) target = $region71
              $region68: #{es_forward.1} parent=63 // loop_body
                %v675 = vld [vmem:[%s673] sm:$0xff]
                %676 = vst [vmem:[%s674] sm:$0xff] %v675
                %v677 = vld [vmem:[%s673 + $0x8] sm:$0xff]
                %678 = vst [vmem:[%s674 + $0x8] sm:$0xff] %v677
                %v679 = vld [vmem:[%s673 + $0x10] sm:$0xff]
                %680 = vst [vmem:[%s674 + $0x10] sm:$0xff] %v679
                %v681 = vld [vmem:[%s673 + $0x18] sm:$0xff]
                %682 = vst [vmem:[%s674 + $0x18] sm:$0xff] %v681
                %s683 = sadd.s32 1, %s672
                %p684 = scmp.ge.s32.totalorder %s683, %s665
                %s685 = scalar_select %p684, 0, %s683
                %s686 = smul.u32 %s685, 32
                %s687 = smul.u32 %s685, 32
                %s688 = scalar_lea.vmem %s645, %s686 [#allocation2]
                %s689 = scalar_lea.vmem %s656, %s687
              $region69: #{es_forward.1} parent=63 // loop_footer
                %s669 = sadd.s32 %s667, 1
              $region70: #{es_forward.1} parent=63 // loop_footer_branch
                %666 = sbr.rel target = $region66
              $region71: #{es_forward.1} parent=63 // loop_exit
                _
              %s690 = sshrl.u32 %s652, 2
              %s691 = sand.u32 %s652, 3
              %s692 = smul.u32 %s690, 4
              %s693 = smul.u32 8, %s692
              %s694 = scalar_lea.vmem %s645, %s693 [#allocation2]
              %s695 = smul.u32 8, %s692
              %s696 = scalar_lea.vmem %s656, %s695
              // While loop
              $region72: #{es_forward.1} parent=63 // loop_pre_header
                _
              $region73: #{es_forward.1} parent=63 // loop_header
                %s698 = sphi 0, %s700
                %p699 = scmp.ge.s32.totalorder %s698, %s691
                %s703 = sphi 0, %s710
                %s704 = sphi %s694, %s713
                %s705 = sphi %s696, %s714
              $region74: #{es_forward.1} parent=63 // loop_header_branch
                %702 = sbr.rel (%p699) target = $region78
              $region75: #{es_forward.1} parent=63 // loop_body
                %v706 = vld [vmem:[%s704] sm:$0xff]
                %707 = vst [vmem:[%s705] sm:$0xff] %v706
                %s708 = sadd.s32 1, %s703
                %p709 = scmp.ge.s32.totalorder %s708, %s691
                %s710 = scalar_select %p709, 0, %s708
                %s711 = smul.u32 %s710, 8
                %s712 = smul.u32 %s710, 8
                %s713 = scalar_lea.vmem %s694, %s711 [#allocation2]
                %s714 = scalar_lea.vmem %s696, %s712
              $region76: #{es_forward.1} parent=63 // loop_footer
                %s700 = sadd.s32 %s698, 1
              $region77: #{es_forward.1} parent=63 // loop_footer_branch
                %697 = sbr.rel target = $region73
              $region78: #{es_forward.1} parent=63 // loop_exit
                _
            $region64: #{es_forward.1} parent=55 // pred_fallthru
              _
          $region56: #{es_forward.1} parent=51 // pred_fallthru
            _
          %769 = vnop
        $region52: #{es_forward.1} parent=47 // pred_fallthru
          _
      $region48: #{es_forward.1} parent=5 // pred_fallthru
        _
      %p770 = scmp.le.s32.totalorder 2, %s13
      // Predicated region
      $region101: #{es_forward.1} parent=5 // pred_check
        %p771 = pneg %p770
      $region102: #{es_forward.1} parent=5 // pred_check_branch
        %773 = sbr.rel (%p771) target = $region104
      $region103: #{es_forward.1} parent=5 // pred_region
        %s774 = ssub.s32 %s13, 2
        // Predicated region
        $region105: #{es_forward.1} parent=103 // pred_check
          %p775 = pneg %p194
        $region106: #{es_forward.1} parent=103 // pred_check_branch
          %777 = sbr.rel (%p775) target = $region108
        $region107: #{es_forward.1} parent=103 // pred_region
          %s778 = sand.u32 %s179, 1
          %s779 = sand.u32 %s179, 1
          %s780 = smul.addr %s779, 32
          %s781 = scalar_lea.vmem [#allocation2], %s780
        $region108: #{es_forward.1} parent=103 // pred_fallthru
          _
      $region104: #{es_forward.1} parent=5 // pred_fallthru
        _
    $region6: #{es_forward.1} parent=1 // loop_footer
      %s17 = sadd.s32 1, %s13
    $region7: #{es_forward.1} parent=1 // loop_footer_branch
      %12 = sbr.rel target = $region3
    $region8: #{es_forward.1} parent=1 // loop_exit
      _

</llo_original>
